<compile_context>
chip_gen: v7x
topology: tpu7x:2x2x1
jax: 0.10.0
libtpu: 0.0.40
codegen_flags: <defaults>
</compile_context>

<pallas_src>
import numpy as np
import jax
import jax.numpy as jnp
from jax.experimental import pallas as pl
from jax.experimental.pallas import tpu as pltpu

FLIPS = ((False, False), (False, True), (True, False), (True, True))  # (flip_h, flip_w)
T = len(FLIPS)


def _round_up(x, m):
    return (x + m - 1) // m * m


# ------------------------ host-side folding of the TTA transforms + Merger('mean') ------
def _flip_kernel(w_hwio, fh, fw):
    """Effective conv kernel of deaugment_t ∘ model ∘ augment_t for a 3x3 SAME conv."""
    k = w_hwio[::-1] if fh else w_hwio          # flip along kernel-H
    k = k[:, ::-1] if fw else k                 # flip along kernel-W
    return k


def _build_merged_bands(w_np, Wp, C_in, W, C_out, KP, MP):
    """band[dy] : (KP, MP).  Rows index (w_p, c_in) of one padded image row; columns index
    (w, c_out) of the *merged* output.  Since the model is linear and merge_mode == 'mean',
    mean_t deaug_t(model(aug_t(x))) == conv(x, mean_t flip_t(K)), so the Merger is folded into
    the band weights in f32 on the host (valid for 'mean'/'sum'; 'max'/'gmean' would need the
    per-transform lane-stacked formulation instead)."""
    k_avg = np.zeros_like(w_np)                              # (3, 3, C_in, C_out), f32
    for fh, fw in FLIPS:
        k_avg += _flip_kernel(w_np, fh, fw)
    k_avg /= T

    bands = np.zeros((3, KP, MP), np.float32)
    for dy in range(3):
        for w in range(W):
            c0 = w * C_out
            for dx in range(3):
                r0 = (w + dx) * C_in
                bands[dy, r0:r0 + C_in, c0:c0 + C_out] = k_avg[dy, dx]
    return bands


# ------------------------------------------------------------------------- wrapper ------
def segmentation_tta_forward(image_nchw, w_hwio, bias):
    """Equivalent of SegmentationTTAWrapper.forward for the synthetic conv model + D2 flips."""
    N, C_in, H, W = image_nchw.shape
    KH, KW, _, C_out = w_hwio.shape
    assert (KH, KW) == (3, 3)
    Hp, Wp = H + 2, W + 2

    NP = _round_up(N, 16)          # rows per padded image row; 16 => bf16-sublane-aligned dy*NP
    K_raw = Wp * C_in              # contraction width of one padded image row
    M_raw = W * C_out              # merged output width (Merger already folded into weights)
    KP = _round_up(K_raw, 128)
    MP = _round_up(M_raw, 128)
    HpN = Hp * NP                  # rows of the padded slab
    HN = H * NP                    # matmul M dimension (256 at the toy size)

    # glue: NCHW -> zero-padded slab, rows ordered (h_p, n), lanes (w_p, c_in); bf16 for the MXU.
    # Single transpose+pad fusion (no transpose of an already-padded tensor as in v1).
    x_t = jnp.transpose(image_nchw, (2, 0, 3, 1)).astype(jnp.float32)     # (H, N, W, C_in)
    x_pad = jnp.pad(x_t, ((1, 1), (0, NP - N), (1, 1), (0, 0)))           # (Hp, NP, Wp, C_in)
    x2d = x_pad.reshape(HpN, K_raw)
    x2d = jnp.pad(x2d, ((0, 0), (0, KP - K_raw))).astype(jnp.bfloat16)    # (HpN, KP)

    w_np = np.asarray(w_hwio, np.float32)
    b_np = np.asarray(bias, np.float32)

    bands = jnp.asarray(_build_merged_bands(w_np, Wp, C_in, W, C_out, KP, MP), jnp.bfloat16)
    bias_row = np.zeros((1, MP), np.float32)
    bias_row[0, :M_raw] = np.tile(b_np, W)       # merged lanes are (w, c_out); mean(bias) == bias
    bias_row = jnp.asarray(bias_row)

    # ----------------------------------------------------------------- the Pallas kernel ----
    def _tta_kernel(x_ref, band_ref, bias_ref, o_ref):
        f32 = jnp.float32
        # augment -> model -> deaugment -> mean-merge, all folded into 3 banded bf16 MXU
        # matmuls with f32 accumulation; each kernel-row dy is a contiguous, 16-sublane-aligned
        # static slice of the padded slab (starts 0, NP, 2*NP).
        acc = jnp.dot(x_ref[pl.ds(0, HN), :], band_ref[0], preferred_element_type=f32)
        acc = acc + jnp.dot(x_ref[pl.ds(NP, HN), :], band_ref[1], preferred_element_type=f32)
        acc = acc + jnp.dot(x_ref[pl.ds(2 * NP, HN), :], band_ref[2], preferred_element_type=f32)
        o_ref[...] = acc + bias_ref[...]         # conv bias over MP lanes (mean-invariant)

    cost = pl.CostEstimate(
        flops=int(2 * 3 * HN * KP * MP),
        transcendentals=0,
        bytes_accessed=int(x2d.size * 2 + bands.size * 2 + bias_row.size * 4 + HN * MP * 4),
    )

    out2d = pl.pallas_call(
        _tta_kernel,
        out_shape=jax.ShapeDtypeStruct((HN, MP), jnp.float32),
        grid_spec=pltpu.PrefetchScalarGridSpec(
            num_scalar_prefetch=0,
            grid=(1,),                                            # whole problem < 0.5 MiB
            in_specs=[
                pl.BlockSpec((HpN, KP), lambda i: (0, 0)),        # padded image slab (bf16)
                pl.BlockSpec((3, KP, MP), lambda i: (0, 0, 0)),   # mean-merged TTA conv bands
                pl.BlockSpec((1, MP), lambda i: (0, 0)),          # merged conv bias (f32)
            ],
            out_specs=pl.BlockSpec((HN, MP), lambda i: (0, 0)),   # lane-dense merged output
        ),
        compiler_params=pltpu.CompilerParams(
            dimension_semantics=("arbitrary",),
            vmem_limit_bytes=16 * 1024 * 1024,
        ),
        cost_estimate=cost,
    )(x2d, bands, bias_row)

    # glue: (h, n)-row x (w, c_out)-lane slab -> NCHW, dropping the NP-N padded batch rows.
    out = out2d[:, :M_raw].reshape(H, NP, W, C_out)[:, :N]
    return jnp.transpose(out, (1, 3, 0, 2))


# ---------------------------------------------------------------- plain-JAX reference ---
def _reference(image_nchw, w_hwio, bias):
    x = jnp.transpose(image_nchw, (0, 2, 3, 1)).astype(jnp.float32)

    def model(img):
        y = jax.lax.conv_general_dilated(img, w_hwio, (1, 1), 'SAME',
                                         dimension_numbers=('NHWC', 'HWIO', 'NHWC'))
        return y + bias[None, None, None, :]

    acc = 0.0
    for fh, fw in FLIPS:
        xi = x
        if fh: xi = xi[:, ::-1, :, :]
        if fw: xi = xi[:, :, ::-1, :]
        yi = model(xi)
        if fh: yi = yi[:, ::-1, :, :]
        if fw: yi = yi[:, :, ::-1, :]
        acc = acc + yi
    return jnp.transpose(acc / len(FLIPS), (0, 3, 1, 2))


if __name__ == "__main__":
    key = jax.random.PRNGKey(0)
    kx, kw, kb = jax.random.split(key, 3)
    N, C_in, H, W, C_out = 2, 4, 16, 16, 2

    x = jax.random.normal(kx, (N, C_in, H, W), jnp.float32)            # PyTorch NCHW input
    w = 0.1 * jax.random.normal(kw, (3, 3, C_in, C_out), jnp.float32)  # conv weight (HWIO)
    b = 0.05 * jax.random.normal(kb, (C_out,), jnp.float32)            # conv bias

    out = segmentation_tta_forward(x, w, b)
    out = jax.block_until_ready(out)

    ref = _reference(x, w, b)
    assert out.shape == (N, C_out, H, W)
    assert bool(jnp.allclose(out, ref, atol=5e-2, rtol=5e-2)), \
        float(jnp.max(jnp.abs(out - ref)))
    print("KERNEL_OK")
</pallas_src>

<mosaic_0001>
module attributes {stable_mosaic.version = 11 : i64} {
  func.func @_tta_kernel(%arg0: i32, %arg1: memref<288x128xbf16, #tpu.memory_space<vmem>>, %arg2: memref<3x128x128xbf16, #tpu.memory_space<vmem>>, %arg3: memref<1x128xf32, #tpu.memory_space<vmem>>, %arg4: memref<256x128xf32, #tpu.memory_space<vmem>>) attributes {dimension_semantics = [#tpu.dimension_semantics<arbitrary>], iteration_bounds = array<i64: 1>, scalar_prefetch = 0 : i64, scratch_operands = 0 : i64, tpu.core_type = #tpu.core_type<tc>, window_params = [{pipeline_mode = #tpu.pipeline_mode<synchronous>, transform_indices = @transform_0, window_bounds = array<i64: 288, 128>}, {pipeline_mode = #tpu.pipeline_mode<synchronous>, transform_indices = @transform_1, window_bounds = array<i64: 3, 128, 128>}, {pipeline_mode = #tpu.pipeline_mode<synchronous>, transform_indices = @transform_2, window_bounds = array<i64: 1, 128>}, {pipeline_mode = #tpu.pipeline_mode<synchronous>, transform_indices = @transform_3, window_bounds = array<i64: 256, 128>}]} {
    %c0 = arith.constant 0 : index
    %c0_0 = arith.constant 0 : index
    %0 = vector.load %arg1[%c0, %c0_0] : memref<288x128xbf16, #tpu.memory_space<vmem>>, vector<256x128xbf16>
    %c0_1 = arith.constant 0 : index
    %c0_2 = arith.constant 0 : index
    %c0_3 = arith.constant 0 : index
    %1 = vector.load %arg2[%c0_1, %c0_2, %c0_3] : memref<3x128x128xbf16, #tpu.memory_space<vmem>>, vector<1x128x128xbf16>
    %2 = vector.shape_cast %1 : vector<1x128x128xbf16> to vector<128x128xbf16>
    %cst = arith.constant dense<0.000000e+00> : vector<256x128xf32>
    %3 = tpu.matmul %0, %2, %cst {dimension_numbers = #tpu.dot_dimension_numbers<[1], [0], [0], [1], [0, 0, 1, 1], [], []>} : vector<256x128xbf16>, vector<128x128xbf16>, vector<256x128xf32> -> vector<256x128xf32>
    %c16 = arith.constant 16 : index
    %c0_4 = arith.constant 0 : index
    %4 = vector.load %arg1[%c16, %c0_4] : memref<288x128xbf16, #tpu.memory_space<vmem>>, vector<256x128xbf16>
    %c1 = arith.constant 1 : index
    %c0_5 = arith.constant 0 : index
    %c0_6 = arith.constant 0 : index
    %5 = vector.load %arg2[%c1, %c0_5, %c0_6] : memref<3x128x128xbf16, #tpu.memory_space<vmem>>, vector<1x128x128xbf16>
    %6 = vector.shape_cast %5 : vector<1x128x128xbf16> to vector<128x128xbf16>
    %cst_7 = arith.constant dense<0.000000e+00> : vector<256x128xf32>
    %7 = tpu.matmul %4, %6, %cst_7 {dimension_numbers = #tpu.dot_dimension_numbers<[1], [0], [0], [1], [0, 0, 1, 1], [], []>} : vector<256x128xbf16>, vector<128x128xbf16>, vector<256x128xf32> -> vector<256x128xf32>
    %8 = arith.addf %3, %7 : vector<256x128xf32>
    %c32 = arith.constant 32 : index
    %c0_8 = arith.constant 0 : index
    %9 = vector.load %arg1[%c32, %c0_8] : memref<288x128xbf16, #tpu.memory_space<vmem>>, vector<256x128xbf16>
    %c2 = arith.constant 2 : index
    %c0_9 = arith.constant 0 : index
    %c0_10 = arith.constant 0 : index
    %10 = vector.load %arg2[%c2, %c0_9, %c0_10] : memref<3x128x128xbf16, #tpu.memory_space<vmem>>, vector<1x128x128xbf16>
    %11 = vector.shape_cast %10 : vector<1x128x128xbf16> to vector<128x128xbf16>
    %cst_11 = arith.constant dense<0.000000e+00> : vector<256x128xf32>
    %12 = tpu.matmul %9, %11, %cst_11 {dimension_numbers = #tpu.dot_dimension_numbers<[1], [0], [0], [1], [0, 0, 1, 1], [], []>} : vector<256x128xbf16>, vector<128x128xbf16>, vector<256x128xf32> -> vector<256x128xf32>
    %13 = arith.addf %8, %12 : vector<256x128xf32>
    %c0_12 = arith.constant 0 : index
    %c0_13 = arith.constant 0 : index
    %14 = vector.load %arg3[%c0_12, %c0_13] : memref<1x128xf32, #tpu.memory_space<vmem>>, vector<1x128xf32>
    %15 = vector.broadcast %14 : vector<1x128xf32> to vector<256x128xf32>
    %16 = arith.addf %13, %15 : vector<256x128xf32>
    %c0_14 = arith.constant 0 : index
    %c0_15 = arith.constant 0 : index
    %17 = vector.load %arg4[%c0_14, %c0_15] : memref<256x128xf32, #tpu.memory_space<vmem>>, vector<256x128xf32>
    tpu.vector_store %arg4[%c0_14, %c0_15], %16 {strides = array<i32>} : memref<256x128xf32, #tpu.memory_space<vmem>>, vector<256x128xf32>,
    return
  }
  func.func @transform_0(%arg0: i32) -> (i32, i32) {
    %c0_i32 = arith.constant 0 : i32
    %c0_i32_0 = arith.constant 0 : i32
    %c0_i32_1 = arith.constant 0 : i32
    return %c0_i32, %c0_i32_0 : i32, i32
  }
  func.func @transform_1(%arg0: i32) -> (i32, i32, i32) {
    %c0_i32 = arith.constant 0 : i32
    %c0_i32_0 = arith.constant 0 : i32
    %c0_i32_1 = arith.constant 0 : i32
    %c0_i32_2 = arith.constant 0 : i32
    return %c0_i32, %c0_i32_0, %c0_i32_1 : i32, i32, i32
  }
  func.func @transform_2(%arg0: i32) -> (i32, i32) {
    %c0_i32 = arith.constant 0 : i32
    %c0_i32_0 = arith.constant 0 : i32
    %c0_i32_1 = arith.constant 0 : i32
    return %c0_i32, %c0_i32_0 : i32, i32
  }
  func.func @transform_3(%arg0: i32) -> (i32, i32) {
    %c0_i32 = arith.constant 0 : i32
    %c0_i32_0 = arith.constant 0 : i32
    %c0_i32_1 = arith.constant 0 : i32
    return %c0_i32, %c0_i32_0 : i32, i32
  }
}

</mosaic_0001>

<llo_original>
// kernel: tpu_custom_call.1
$region0: #{tpu_custom_call.1}
  #allocation0 [shape = 'u32[]', space=smem, size = 0x4, offset = 0x4, fixed_abs, tag = 'smem constant byte address 0x4 - core index']
  #allocation1 [shape = 'u32[144,128]{1,0:T(1,128)}', space=vmem, size = 0x12000, scoped, tag = 'internal scratch']
  %s0 = inlined_call_operand.hbm [shape: bf16[288,128], index: 0, kind: input, shape index: {}]
  %s1 = inlined_call_operand.hbm [shape: bf16[3,128,128], index: 1, kind: input, shape index: {}]
  %s2 = inlined_call_operand.vmem [shape: f32[1,128], index: 2, kind: input, shape index: {}]
  %s3 = inlined_call_operand.hbm [shape: f32[256,128], index: 3, kind: output, shape index: {}]
  %s4 = sld [smem:[#allocation0]]
  $region30: #{tpu_custom_call.1} parent=0
    _
  %s6 = ssub.s32 1, %s4
  %s7 = scalar_select 0, %s6, %s4
  $region1: #{tpu_custom_call.1} parent=0
    #allocation2 [shape = 'u8[73728]{0}', space=vmem, size = 0x12000, scoped, tag = 'input window, operand 0, single buffered']
    #allocation3 [shape = 's32[1]{0}', space=sflag, size = 0x4, scoped, tag = 'scoped memory for tpu_custom_call.1']
    #allocation4 [shape = 's32[1]{0}', space=sflag, size = 0x4, scoped, tag = 'scoped memory for tpu_custom_call.1']
    #allocation5 [shape = 'u8[98304]{0}', space=vmem, size = 0x18000, scoped, tag = 'input window, operand 1, single buffered']
    #allocation6 [shape = 's32[1]{0}', space=sflag, size = 0x4, scoped, tag = 'scoped memory for tpu_custom_call.1']
    #allocation7 [shape = 'u8[131072]{0}', space=vmem, size = 0x20000, scoped, tag = 'output window, operand 0, single buffered']
    %8 = vsyncpa [#allocation3], 0
    %9 = vsyncpa [#allocation6], 0
    %10 = vsyncpa [#allocation4], 0
    // Predicated region
    $region2: #{tpu_custom_call.1} parent=1 // pred_check
      _
    $region3: #{tpu_custom_call.1} parent=1 // pred_check_branch
      %12 = sbr.rel (0) target = $region5
    $region4: #{tpu_custom_call.1} parent=1 // pred_region
      %s14 = ssub.s32 2304, 2304
      %15 = vsyncadd [#allocation3], %s14
      %s16 = sshll.u32 [#allocation2], 4
      %s17 = int_to_ptr.vmem [resolvable:$true] %s16
      %22 = dma.hbm_to_vmem [thread:$0]  %s0, 2304, %s17, [#allocation3], 64, 64, 4
    $region5: #{tpu_custom_call.1} parent=1 // pred_fallthru
      _
    // Predicated region
    $region6: #{tpu_custom_call.1} parent=1 // pred_check
      _
    $region7: #{tpu_custom_call.1} parent=1 // pred_check_branch
      %24 = sbr.rel (0) target = $region9
    $region8: #{tpu_custom_call.1} parent=1 // pred_region
      %s26 = ssub.s32 3072, 3072
      %27 = vsyncadd [#allocation6], %s26
      %s28 = sshll.u32 [#allocation5], 4
      %s29 = int_to_ptr.vmem [resolvable:$true] %s28
      %34 = dma.hbm_to_vmem [thread:$0]  %s1, 3072, %s29, [#allocation6], 64, 64, 4
    $region9: #{tpu_custom_call.1} parent=1 // pred_fallthru
      _
    // Predicated region
    $region10: #{tpu_custom_call.1} parent=1 // pred_check
      _
    $region11: #{tpu_custom_call.1} parent=1 // pred_check_branch
      %36 = sbr.rel (0) target = $region13
    $region12: #{tpu_custom_call.1} parent=1 // pred_region
      _
    $region13: #{tpu_custom_call.1} parent=1 // pred_fallthru
      _
    // Predicated region
    $region14: #{tpu_custom_call.1} parent=1 // pred_check
      _
    $region15: #{tpu_custom_call.1} parent=1 // pred_check_branch
      %38 = sbr.rel (0) target = $region17
    $region16: #{tpu_custom_call.1} parent=1 // pred_region
      %39 = dma.done [#allocation3], 2304
    $region17: #{tpu_custom_call.1} parent=1 // pred_fallthru
      _
    // Predicated region
    $region18: #{tpu_custom_call.1} parent=1 // pred_check
      _
    $region19: #{tpu_custom_call.1} parent=1 // pred_check_branch
      %41 = sbr.rel (0) target = $region21
    $region20: #{tpu_custom_call.1} parent=1 // pred_region
      %42 = dma.done [#allocation6], 3072
    $region21: #{tpu_custom_call.1} parent=1 // pred_fallthru
      _
    %v44 = vld [vmem:[#allocation2] sm:$0xf]
    %v45 = vld [vmem:[#allocation2 + $0x4] sm:$0xf]
    %v46 = vld [vmem:[#allocation2 + $0x8] sm:$0xf]
    %v47 = vld [vmem:[#allocation2 + $0xc] sm:$0xf]
    %v48 = vld [vmem:[#allocation2 + $0x10] sm:$0xf]
    %v49 = vld [vmem:[#allocation2 + $0x14] sm:$0xf]
    %v50 = vld [vmem:[#allocation2 + $0x18] sm:$0xf]
    %v51 = vld [vmem:[#allocation2 + $0x1c] sm:$0xf]
    %v52 = vld [vmem:[#allocation2 + $0x20] sm:$0xf]
    %v53 = vld [vmem:[#allocation2 + $0x24] sm:$0xf]
    %v54 = vld [vmem:[#allocation2 + $0x28] sm:$0xf]
    %v55 = vld [vmem:[#allocation2 + $0x2c] sm:$0xf]
    %v56 = vld [vmem:[#allocation2 + $0x30] sm:$0xf]
    %v57 = vld [vmem:[#allocation2 + $0x34] sm:$0xf]
    %v58 = vld [vmem:[#allocation2 + $0x38] sm:$0xf]
    %v59 = vld [vmem:[#allocation2 + $0x3c] sm:$0xf]
    %v60 = vld [vmem:[#allocation2 + $0x40] sm:$0xf]
    %v61 = vld [vmem:[#allocation2 + $0x44] sm:$0xf]
    %v62 = vld [vmem:[#allocation2 + $0x48] sm:$0xf]
    %v63 = vld [vmem:[#allocation2 + $0x4c] sm:$0xf]
    %v64 = vld [vmem:[#allocation2 + $0x50] sm:$0xf]
    %v65 = vld [vmem:[#allocation2 + $0x54] sm:$0xf]
    %v66 = vld [vmem:[#allocation2 + $0x58] sm:$0xf]
    %v67 = vld [vmem:[#allocation2 + $0x5c] sm:$0xf]
    %v68 = vld [vmem:[#allocation2 + $0x60] sm:$0xf]
    %v69 = vld [vmem:[#allocation2 + $0x64] sm:$0xf]
    %v70 = vld [vmem:[#allocation2 + $0x68] sm:$0xf]
    %v71 = vld [vmem:[#allocation2 + $0x6c] sm:$0xf]
    %v72 = vld [vmem:[#allocation2 + $0x70] sm:$0xf]
    %v73 = vld [vmem:[#allocation2 + $0x74] sm:$0xf]
    %v74 = vld [vmem:[#allocation2 + $0x78] sm:$0xf]
    %v75 = vld [vmem:[#allocation2 + $0x7c] sm:$0xf]
    %v76 = vld [vmem:[#allocation5] sm:$0xf]
    %v77 = vld [vmem:[#allocation5 + $0x4] sm:$0xf]
    %v78 = vld [vmem:[#allocation5 + $0x8] sm:$0xf]
    %v79 = vld [vmem:[#allocation5 + $0xc] sm:$0xf]
    %v80 = vld [vmem:[#allocation5 + $0x10] sm:$0xf]
    %v81 = vld [vmem:[#allocation5 + $0x14] sm:$0xf]
    %v82 = vld [vmem:[#allocation5 + $0x18] sm:$0xf]
    %v83 = vld [vmem:[#allocation5 + $0x1c] sm:$0xf]
    %v84 = vld [vmem:[#allocation5 + $0x20] sm:$0xf]
    %v85 = vld [vmem:[#allocation5 + $0x24] sm:$0xf]
    %v86 = vld [vmem:[#allocation5 + $0x28] sm:$0xf]
    %v87 = vld [vmem:[#allocation5 + $0x2c] sm:$0xf]
    %v88 = vld [vmem:[#allocation5 + $0x30] sm:$0xf]
    %v89 = vld [vmem:[#allocation5 + $0x34] sm:$0xf]
    %v90 = vld [vmem:[#allocation5 + $0x38] sm:$0xf]
    %v91 = vld [vmem:[#allocation5 + $0x3c] sm:$0xf]
    %v92 = vld [vmem:[#allocation2 + $0x80] sm:$0xf]
    %v93 = vld [vmem:[#allocation2 + $0x84] sm:$0xf]
    %s94 = scalar_lea.vmem [#allocation5], 64
    %v95 = vld [vmem:[%s94] sm:$0xf]
    %v96 = vld [vmem:[%s94 + $0x4] sm:$0xf]
    %v97 = vld [vmem:[%s94 + $0x8] sm:$0xf]
    %v98 = vld [vmem:[%s94 + $0xc] sm:$0xf]
    %v99 = vld [vmem:[%s94 + $0x10] sm:$0xf]
    %v100 = vld [vmem:[%s94 + $0x14] sm:$0xf]
    %v101 = vld [vmem:[%s94 + $0x18] sm:$0xf]
    %v102 = vld [vmem:[%s94 + $0x1c] sm:$0xf]
    %v103 = vld [vmem:[%s94 + $0x20] sm:$0xf]
    %v104 = vld [vmem:[%s94 + $0x24] sm:$0xf]
    %v105 = vld [vmem:[%s94 + $0x28] sm:$0xf]
    %v106 = vld [vmem:[%s94 + $0x2c] sm:$0xf]
    %v107 = vld [vmem:[%s94 + $0x30] sm:$0xf]
    %v108 = vld [vmem:[%s94 + $0x34] sm:$0xf]
    %v109 = vld [vmem:[%s94 + $0x38] sm:$0xf]
    %v110 = vld [vmem:[%s94 + $0x3c] sm:$0xf]
    %v143 = vunpack.c.l.b16 %v46
    %v144 = vunpack.c.l.b16 %v47
    %v145 = vunpack.c.l.b16 %v48
    %v146 = vunpack.c.l.b16 %v49
    %v147 = vunpack.c.l.b16 %v50
    %v148 = vunpack.c.l.b16 %v51
    %v149 = vunpack.c.l.b16 %v52
    %v150 = vunpack.c.l.b16 %v53
    %v151 = vunpack.c.l.b16 %v54
    %v152 = vunpack.c.l.b16 %v55
    %v153 = vunpack.c.l.b16 %v56
    %v154 = vunpack.c.l.b16 %v57
    %v155 = vunpack.c.l.b16 %v58
    %v156 = vunpack.c.l.b16 %v59
    %v157 = vunpack.c.l.b16 %v60
    %v158 = vunpack.c.l.b16 %v61
    %v159 = vunpack.c.l.b16 %v62
    %v160 = vunpack.c.l.b16 %v63
    %v161 = vunpack.c.l.b16 %v64
    %v162 = vunpack.c.l.b16 %v65
    %v163 = vunpack.c.l.b16 %v66
    %v164 = vunpack.c.l.b16 %v67
    %v165 = vunpack.c.l.b16 %v68
    %v166 = vunpack.c.l.b16 %v69
    %v167 = vunpack.c.l.b16 %v70
    %v168 = vunpack.c.l.b16 %v71
    %v169 = vunpack.c.l.b16 %v72
    %v170 = vunpack.c.l.b16 %v73
    %v171 = vunpack.c.l.b16 %v74
    %v172 = vunpack.c.l.b16 %v75
    %v173 = vunpack.c.l.b16 %v92
    %v174 = vunpack.c.l.b16 %v93
    %v175 = vpack.c.b16 %v144, %v143
    %v176 = vpack.c.b16 %v146, %v145
    %v177 = vpack.c.b16 %v148, %v147
    %v178 = vpack.c.b16 %v150, %v149
    %v179 = vpack.c.b16 %v152, %v151
    %v180 = vpack.c.b16 %v154, %v153
    %v181 = vpack.c.b16 %v156, %v155
    %v182 = vpack.c.b16 %v158, %v157
    %v183 = vpack.c.b16 %v160, %v159
    %v184 = vpack.c.b16 %v162, %v161
    %v185 = vpack.c.b16 %v164, %v163
    %v186 = vpack.c.b16 %v166, %v165
    %v187 = vpack.c.b16 %v168, %v167
    %v188 = vpack.c.b16 %v170, %v169
    %v189 = vpack.c.b16 %v172, %v171
    %v190 = vpack.c.b16 %v174, %v173
    %v223 = vunpack.c.l.b16 %v95
    %v224 = vunpack.c.l.b16 %v96
    %v225 = vunpack.c.l.b16 %v97
    %v226 = vunpack.c.l.b16 %v98
    %v227 = vunpack.c.l.b16 %v99
    %v228 = vunpack.c.l.b16 %v100
    %v229 = vunpack.c.l.b16 %v101
    %v230 = vunpack.c.l.b16 %v102
    %v231 = vunpack.c.l.b16 %v103
    %v232 = vunpack.c.l.b16 %v104
    %v233 = vunpack.c.l.b16 %v105
    %v234 = vunpack.c.l.b16 %v106
    %v235 = vunpack.c.l.b16 %v107
    %v236 = vunpack.c.l.b16 %v108
    %v237 = vunpack.c.l.b16 %v109
    %v238 = vunpack.c.l.b16 %v110
    %v239 = vpack.c.b16 %v224, %v223
    %v240 = vpack.c.b16 %v226, %v225
    %v241 = vpack.c.b16 %v228, %v227
    %v242 = vpack.c.b16 %v230, %v229
    %v243 = vpack.c.b16 %v232, %v231
    %v244 = vpack.c.b16 %v234, %v233
    %v245 = vpack.c.b16 %v236, %v235
    %v246 = vpack.c.b16 %v238, %v237
    %255 = vmatprep.subr.bf16.mxu0 0
    %256 = vmatpush1.bf16.msra.mxu0 %v239
    %257 = vmatprep.subr.bf16.mxu0 0
    %258 = vmatpush1.bf16.msra.mxu0 %v240
    %259 = vmatprep.subr.bf16.mxu0 0
    %260 = vmatpush1.bf16.msra.mxu0 %v241
    %261 = vmatprep.subr.bf16.mxu0 0
    %262 = vmatpush1.bf16.msra.mxu0 %v242
    %263 = vmatprep.subr.bf16.mxu0 0
    %264 = vmatpush1.bf16.msra.mxu0 %v243
    %265 = vmatprep.subr.bf16.mxu0 0
    %266 = vmatpush1.bf16.msra.mxu0 %v244
    %267 = vmatprep.subr.bf16.mxu0 0
    %268 = vmatpush1.bf16.msra.mxu0 %v245
    %269 = vmatprep.subr.bf16.mxu0 0
    %270 = vmatpush1.bf16.msra.mxu0 %v246
    %271 = vmatprep.subr.bf16.mxu0 0
    %272 = vmatpush1.bf16.msra.mxu0 0
    %273 = vmatprep.subr.bf16.mxu0 0
    %274 = vmatpush1.bf16.msra.mxu0 0
    %275 = vmatprep.subr.bf16.mxu0 0
    %276 = vmatpush1.bf16.msra.mxu0 0
    %277 = vmatprep.subr.bf16.mxu0 0
    %278 = vmatpush1.bf16.msra.mxu0 0
    %279 = vmatprep.subr.bf16.mxu0 0
    %280 = vmatpush1.bf16.msra.mxu0 0
    %281 = vmatprep.subr.bf16.mxu0 0
    %282 = vmatpush1.bf16.msra.mxu0 0
    %283 = vmatprep.subr.bf16.mxu0 0
    %284 = vmatpush1.bf16.msra.mxu0 0
    %285 = vmatprep.subr.bf16.mxu0 0
    %286 = vmatpush1.bf16.msra.mxu0 0
    %287 = vmatprep.mubr.bf16.mxu0 0
    %288 = vmatmul.mubr.bf16.gmra.mrb[0].mxu0 %v175
    %v289 = vpop.f32.mrb[0].mxu0
    %v290 = vadd.f32 0.0, %v289
    %v291 = vpop.f32.mrb[0].mxu0
    %v292 = vpop.f32.mrb[0].mxu0
    %v293 = vadd.f32 0.0, %v292
    %v294 = vpop.f32.mrb[0].mxu0
    %295 = vmatprep.mubr.bf16.mxu0 0
    %296 = vmatmul.mubr.bf16.gmra.mrb[0].mxu0 %v176
    %v297 = vpop.f32.mrb[0].mxu0
    %v298 = vadd.f32 0.0, %v297
    %v299 = vpop.f32.mrb[0].mxu0
    %v300 = vpop.f32.mrb[0].mxu0
    %v301 = vadd.f32 0.0, %v300
    %v302 = vpop.f32.mrb[0].mxu0
    %303 = vmatprep.mubr.bf16.mxu0 0
    %304 = vmatmul.mubr.bf16.gmra.mrb[0].mxu0 %v177
    %v305 = vpop.f32.mrb[0].mxu0
    %v306 = vadd.f32 0.0, %v305
    %v307 = vpop.f32.mrb[0].mxu0
    %v308 = vpop.f32.mrb[0].mxu0
    %v309 = vadd.f32 0.0, %v308
    %v310 = vpop.f32.mrb[0].mxu0
    %311 = vmatprep.mubr.bf16.mxu0 0
    %312 = vmatmul.mubr.bf16.gmra.mrb[0].mxu0 %v178
    %v313 = vpop.f32.mrb[0].mxu0
    %v314 = vadd.f32 0.0, %v313
    %v315 = vpop.f32.mrb[0].mxu0
    %v316 = vpop.f32.mrb[0].mxu0
    %v317 = vadd.f32 0.0, %v316
    %v318 = vpop.f32.mrb[0].mxu0
    %319 = vmatprep.mubr.bf16.mxu0 0
    %320 = vmatmul.mubr.bf16.gmra.mrb[0].mxu0 %v179
    %v321 = vpop.f32.mrb[0].mxu0
    %v322 = vadd.f32 0.0, %v321
    %v323 = vpop.f32.mrb[0].mxu0
    %v324 = vpop.f32.mrb[0].mxu0
    %v325 = vadd.f32 0.0, %v324
    %v326 = vpop.f32.mrb[0].mxu0
    %327 = vmatprep.mubr.bf16.mxu0 0
    %328 = vmatmul.mubr.bf16.gmra.mrb[0].mxu0 %v180
    %v329 = vpop.f32.mrb[0].mxu0
    %v330 = vadd.f32 0.0, %v329
    %v331 = vpop.f32.mrb[0].mxu0
    %v332 = vpop.f32.mrb[0].mxu0
    %v333 = vadd.f32 0.0, %v332
    %v334 = vpop.f32.mrb[0].mxu0
    %335 = vmatprep.mubr.bf16.mxu0 0
    %336 = vmatmul.mubr.bf16.gmra.mrb[0].mxu0 %v181
    %v337 = vpop.f32.mrb[0].mxu0
    %v338 = vadd.f32 0.0, %v337
    %v339 = vpop.f32.mrb[0].mxu0
    %v340 = vpop.f32.mrb[0].mxu0
    %v341 = vadd.f32 0.0, %v340
    %v342 = vpop.f32.mrb[0].mxu0
    %343 = vmatprep.mubr.bf16.mxu0 0
    %344 = vmatmul.mubr.bf16.gmra.mrb[0].mxu0 %v182
    %v345 = vpop.f32.mrb[0].mxu0
    %v346 = vadd.f32 0.0, %v345
    %v347 = vpop.f32.mrb[0].mxu0
    %v348 = vpop.f32.mrb[0].mxu0
    %v349 = vadd.f32 0.0, %v348
    %v350 = vpop.f32.mrb[0].mxu0
    %351 = vmatprep.mubr.bf16.mxu0 0
    %352 = vmatmul.mubr.bf16.gmra.mrb[0].mxu0 %v183
    %v353 = vpop.f32.mrb[0].mxu0
    %v354 = vadd.f32 0.0, %v353
    %v355 = vpop.f32.mrb[0].mxu0
    %v356 = vpop.f32.mrb[0].mxu0
    %v357 = vadd.f32 0.0, %v356
    %v358 = vpop.f32.mrb[0].mxu0
    %359 = vmatprep.mubr.bf16.mxu0 0
    %360 = vmatmul.mubr.bf16.gmra.mrb[0].mxu0 %v184
    %v361 = vpop.f32.mrb[0].mxu0
    %v362 = vadd.f32 0.0, %v361
    %v363 = vpop.f32.mrb[0].mxu0
    %v364 = vpop.f32.mrb[0].mxu0
    %v365 = vadd.f32 0.0, %v364
    %v366 = vpop.f32.mrb[0].mxu0
    %367 = vmatprep.mubr.bf16.mxu0 0
    %368 = vmatmul.mubr.bf16.gmra.mrb[0].mxu0 %v185
    %v369 = vpop.f32.mrb[0].mxu0
    %v370 = vadd.f32 0.0, %v369
    %v371 = vpop.f32.mrb[0].mxu0
    %v372 = vpop.f32.mrb[0].mxu0
    %v373 = vadd.f32 0.0, %v372
    %v374 = vpop.f32.mrb[0].mxu0
    %375 = vmatprep.mubr.bf16.mxu0 0
    %376 = vmatmul.mubr.bf16.gmra.mrb[0].mxu0 %v186
    %v377 = vpop.f32.mrb[0].mxu0
    %v378 = vadd.f32 0.0, %v377
    %v379 = vpop.f32.mrb[0].mxu0
    %v380 = vpop.f32.mrb[0].mxu0
    %v381 = vadd.f32 0.0, %v380
    %v382 = vpop.f32.mrb[0].mxu0
    %383 = vmatprep.mubr.bf16.mxu0 0
    %384 = vmatmul.mubr.bf16.gmra.mrb[0].mxu0 %v187
    %v385 = vpop.f32.mrb[0].mxu0
    %v386 = vadd.f32 0.0, %v385
    %v387 = vpop.f32.mrb[0].mxu0
    %v388 = vpop.f32.mrb[0].mxu0
    %v389 = vadd.f32 0.0, %v388
    %v390 = vpop.f32.mrb[0].mxu0
    %391 = vmatprep.mubr.bf16.mxu0 0
    %392 = vmatmul.mubr.bf16.gmra.mrb[0].mxu0 %v188
    %v393 = vpop.f32.mrb[0].mxu0
    %v394 = vadd.f32 0.0, %v393
    %v395 = vpop.f32.mrb[0].mxu0
    %v396 = vpop.f32.mrb[0].mxu0
    %v397 = vadd.f32 0.0, %v396
    %v398 = vpop.f32.mrb[0].mxu0
    %399 = vmatprep.mubr.bf16.mxu0 0
    %400 = vmatmul.mubr.bf16.gmra.mrb[0].mxu0 %v189
    %v401 = vpop.f32.mrb[0].mxu0
    %v402 = vadd.f32 0.0, %v401
    %v403 = vpop.f32.mrb[0].mxu0
    %v404 = vpop.f32.mrb[0].mxu0
    %v405 = vadd.f32 0.0, %v404
    %v406 = vpop.f32.mrb[0].mxu0
    %407 = vmatprep.mubr.bf16.mxu0 0
    %408 = vmatmul.mubr.bf16.gmra.mrb[0].mxu0 %v190
    %v409 = vpop.f32.mrb[0].mxu0
    %v410 = vadd.f32 0.0, %v409
    %v411 = vpop.f32.mrb[0].mxu0
    %v412 = vpop.f32.mrb[0].mxu0
    %v413 = vadd.f32 0.0, %v412
    %v414 = vpop.f32.mrb[0].mxu0
    %415 = vdwg.mxu0
    %v418 = vunpack.c.l.b16 %v44
    %v419 = vunpack.c.l.b16 %v45
    %v420 = vpack.c.b16 %v419, %v418
    %v438 = vunpack.c.l.b16 %v76
    %v439 = vunpack.c.l.b16 %v77
    %v440 = vunpack.c.l.b16 %v78
    %v441 = vunpack.c.l.b16 %v79
    %v442 = vunpack.c.l.b16 %v80
    %v443 = vunpack.c.l.b16 %v81
    %v444 = vunpack.c.l.b16 %v82
    %v445 = vunpack.c.l.b16 %v83
    %v446 = vunpack.c.l.b16 %v84
    %v447 = vunpack.c.l.b16 %v85
    %v448 = vunpack.c.l.b16 %v86
    %v449 = vunpack.c.l.b16 %v87
    %v450 = vunpack.c.l.b16 %v88
    %v451 = vunpack.c.l.b16 %v89
    %v452 = vunpack.c.l.b16 %v90
    %v453 = vunpack.c.l.b16 %v91
    %v454 = vpack.c.b16 %v439, %v438
    %v455 = vpack.c.b16 %v441, %v440
    %v456 = vpack.c.b16 %v443, %v442
    %v457 = vpack.c.b16 %v445, %v444
    %v458 = vpack.c.b16 %v447, %v446
    %v459 = vpack.c.b16 %v449, %v448
    %v460 = vpack.c.b16 %v451, %v450
    %v461 = vpack.c.b16 %v453, %v452
    %470 = vmatprep.subr.bf16.mxu0 0
    %471 = vmatpush1.bf16.msra.mxu0 %v454
    %472 = vmatprep.subr.bf16.mxu0 0
    %473 = vmatpush1.bf16.msra.mxu0 %v455
    %474 = vmatprep.subr.bf16.mxu0 0
    %475 = vmatpush1.bf16.msra.mxu0 %v456
    %476 = vmatprep.subr.bf16.mxu0 0
    %477 = vmatpush1.bf16.msra.mxu0 %v457
    %478 = vmatprep.subr.bf16.mxu0 0
    %479 = vmatpush1.bf16.msra.mxu0 %v458
    %480 = vmatprep.subr.bf16.mxu0 0
    %481 = vmatpush1.bf16.msra.mxu0 %v459
    %482 = vmatprep.subr.bf16.mxu0 0
    %483 = vmatpush1.bf16.msra.mxu0 %v460
    %484 = vmatprep.subr.bf16.mxu0 0
    %485 = vmatpush1.bf16.msra.mxu0 %v461
    %486 = vmatprep.subr.bf16.mxu0 0
    %487 = vmatpush1.bf16.msra.mxu0 0
    %488 = vmatprep.subr.bf16.mxu0 0
    %489 = vmatpush1.bf16.msra.mxu0 0
    %490 = vmatprep.subr.bf16.mxu0 0
    %491 = vmatpush1.bf16.msra.mxu0 0
    %492 = vmatprep.subr.bf16.mxu0 0
    %493 = vmatpush1.bf16.msra.mxu0 0
    %494 = vmatprep.subr.bf16.mxu0 0
    %495 = vmatpush1.bf16.msra.mxu0 0
    %496 = vmatprep.subr.bf16.mxu0 0
    %497 = vmatpush1.bf16.msra.mxu0 0
    %498 = vmatprep.subr.bf16.mxu0 0
    %499 = vmatpush1.bf16.msra.mxu0 0
    %500 = vmatprep.subr.bf16.mxu0 0
    %501 = vmatpush1.bf16.msra.mxu0 0
    %502 = vmatprep.mubr.bf16.mxu0 0
    %503 = vmatmul.mubr.bf16.gmra.mrb[0].mxu0 %v420
    %v504 = vpop.f32.mrb[0].mxu0
    %v505 = vadd.f32 %v290, %v504
    %v506 = vpop.f32.mrb[0].mxu0
    %v507 = vpop.f32.mrb[0].mxu0
    %v508 = vadd.f32 %v293, %v507
    %v509 = vpop.f32.mrb[0].mxu0
    %510 = vmatprep.mubr.bf16.mxu0 0
    %511 = vmatmul.mubr.bf16.gmra.mrb[0].mxu0 %v175
    %v512 = vpop.f32.mrb[0].mxu0
    %v513 = vadd.f32 %v298, %v512
    %v514 = vpop.f32.mrb[0].mxu0
    %v515 = vpop.f32.mrb[0].mxu0
    %v516 = vadd.f32 %v301, %v515
    %v517 = vpop.f32.mrb[0].mxu0
    %518 = vmatprep.mubr.bf16.mxu0 0
    %519 = vmatmul.mubr.bf16.gmra.mrb[0].mxu0 %v176
    %v520 = vpop.f32.mrb[0].mxu0
    %v521 = vadd.f32 %v306, %v520
    %v522 = vpop.f32.mrb[0].mxu0
    %v523 = vpop.f32.mrb[0].mxu0
    %v524 = vadd.f32 %v309, %v523
    %v525 = vpop.f32.mrb[0].mxu0
    %526 = vmatprep.mubr.bf16.mxu0 0
    %527 = vmatmul.mubr.bf16.gmra.mrb[0].mxu0 %v177
    %v528 = vpop.f32.mrb[0].mxu0
    %v529 = vadd.f32 %v314, %v528
    %v530 = vpop.f32.mrb[0].mxu0
    %v531 = vpop.f32.mrb[0].mxu0
    %v532 = vadd.f32 %v317, %v531
    %v533 = vpop.f32.mrb[0].mxu0
    %534 = vmatprep.mubr.bf16.mxu0 0
    %535 = vmatmul.mubr.bf16.gmra.mrb[0].mxu0 %v178
    %v536 = vpop.f32.mrb[0].mxu0
    %v537 = vadd.f32 %v322, %v536
    %v538 = vpop.f32.mrb[0].mxu0
    %v539 = vpop.f32.mrb[0].mxu0
    %v540 = vadd.f32 %v325, %v539
    %v541 = vpop.f32.mrb[0].mxu0
    %542 = vmatprep.mubr.bf16.mxu0 0
    %543 = vmatmul.mubr.bf16.gmra.mrb[0].mxu0 %v179
    %v544 = vpop.f32.mrb[0].mxu0
    %v545 = vadd.f32 %v330, %v544
    %v546 = vpop.f32.mrb[0].mxu0
    %v547 = vpop.f32.mrb[0].mxu0
    %v548 = vadd.f32 %v333, %v547
    %v549 = vpop.f32.mrb[0].mxu0
    %550 = vmatprep.mubr.bf16.mxu0 0
    %551 = vmatmul.mubr.bf16.gmra.mrb[0].mxu0 %v180
    %v552 = vpop.f32.mrb[0].mxu0
    %v553 = vadd.f32 %v338, %v552
    %v554 = vpop.f32.mrb[0].mxu0
    %v555 = vpop.f32.mrb[0].mxu0
    %v556 = vadd.f32 %v341, %v555
    %v557 = vpop.f32.mrb[0].mxu0
    %558 = vmatprep.mubr.bf16.mxu0 0
    %559 = vmatmul.mubr.bf16.gmra.mrb[0].mxu0 %v181
    %v560 = vpop.f32.mrb[0].mxu0
    %v561 = vadd.f32 %v346, %v560
    %v562 = vpop.f32.mrb[0].mxu0
    %v563 = vpop.f32.mrb[0].mxu0
    %v564 = vadd.f32 %v349, %v563
    %v565 = vpop.f32.mrb[0].mxu0
    %566 = vmatprep.mubr.bf16.mxu0 0
    %567 = vmatmul.mubr.bf16.gmra.mrb[0].mxu0 %v182
    %v568 = vpop.f32.mrb[0].mxu0
    %v569 = vadd.f32 %v354, %v568
    %v570 = vpop.f32.mrb[0].mxu0
    %v571 = vpop.f32.mrb[0].mxu0
    %v572 = vadd.f32 %v357, %v571
    %v573 = vpop.f32.mrb[0].mxu0
    %574 = vmatprep.mubr.bf16.mxu0 0
    %575 = vmatmul.mubr.bf16.gmra.mrb[0].mxu0 %v183
    %v576 = vpop.f32.mrb[0].mxu0
    %v577 = vadd.f32 %v362, %v576
    %v578 = vpop.f32.mrb[0].mxu0
    %v579 = vpop.f32.mrb[0].mxu0
    %v580 = vadd.f32 %v365, %v579
    %v581 = vpop.f32.mrb[0].mxu0
    %582 = vmatprep.mubr.bf16.mxu0 0
    %583 = vmatmul.mubr.bf16.gmra.mrb[0].mxu0 %v184
    %v584 = vpop.f32.mrb[0].mxu0
    %v585 = vadd.f32 %v370, %v584
    %v586 = vpop.f32.mrb[0].mxu0
    %v587 = vpop.f32.mrb[0].mxu0
    %v588 = vadd.f32 %v373, %v587
    %v589 = vpop.f32.mrb[0].mxu0
    %590 = vmatprep.mubr.bf16.mxu0 0
    %591 = vmatmul.mubr.bf16.gmra.mrb[0].mxu0 %v185
    %v592 = vpop.f32.mrb[0].mxu0
    %v593 = vadd.f32 %v378, %v592
    %v594 = vpop.f32.mrb[0].mxu0
    %v595 = vpop.f32.mrb[0].mxu0
    %v596 = vadd.f32 %v381, %v595
    %v597 = vpop.f32.mrb[0].mxu0
    %598 = vmatprep.mubr.bf16.mxu0 0
    %599 = vmatmul.mubr.bf16.gmra.mrb[0].mxu0 %v186
    %v600 = vpop.f32.mrb[0].mxu0
    %v601 = vadd.f32 %v386, %v600
    %v602 = vpop.f32.mrb[0].mxu0
    %v603 = vpop.f32.mrb[0].mxu0
    %v604 = vadd.f32 %v389, %v603
    %v605 = vpop.f32.mrb[0].mxu0
    %606 = vmatprep.mubr.bf16.mxu0 0
    %607 = vmatmul.mubr.bf16.gmra.mrb[0].mxu0 %v187
    %v608 = vpop.f32.mrb[0].mxu0
    %v609 = vadd.f32 %v394, %v608
    %v610 = vpop.f32.mrb[0].mxu0
    %v611 = vpop.f32.mrb[0].mxu0
    %v612 = vadd.f32 %v397, %v611
    %v613 = vpop.f32.mrb[0].mxu0
    %614 = vmatprep.mubr.bf16.mxu0 0
    %615 = vmatmul.mubr.bf16.gmra.mrb[0].mxu0 %v188
    %v616 = vpop.f32.mrb[0].mxu0
    %v617 = vadd.f32 %v402, %v616
    %v618 = vpop.f32.mrb[0].mxu0
    %v619 = vpop.f32.mrb[0].mxu0
    %v620 = vadd.f32 %v405, %v619
    %v621 = vpop.f32.mrb[0].mxu0
    %622 = vmatprep.mubr.bf16.mxu0 0
    %623 = vmatmul.mubr.bf16.gmra.mrb[0].mxu0 %v189
    %v624 = vpop.f32.mrb[0].mxu0
    %v625 = vadd.f32 %v410, %v624
    %v626 = vpop.f32.mrb[0].mxu0
    %v627 = vpop.f32.mrb[0].mxu0
    %v628 = vadd.f32 %v413, %v627
    %v629 = vpop.f32.mrb[0].mxu0
    %630 = vdwg.mxu0
    %v631 = vld [vmem:[#allocation2 + $0x10] sm:$0xf]
    %v632 = vld [vmem:[#allocation2 + $0x14] sm:$0xf]
    %v633 = vld [vmem:[#allocation2 + $0x18] sm:$0xf]
    %v634 = vld [vmem:[#allocation2 + $0x1c] sm:$0xf]
    %v635 = vld [vmem:[#allocation2 + $0x20] sm:$0xf]
    %v636 = vld [vmem:[#allocation2 + $0x24] sm:$0xf]
    %v637 = vld [vmem:[#allocation2 + $0x28] sm:$0xf]
    %v638 = vld [vmem:[#allocation2 + $0x2c] sm:$0xf]
    %v639 = vld [vmem:[#allocation2 + $0x30] sm:$0xf]
    %v640 = vld [vmem:[#allocation2 + $0x34] sm:$0xf]
    %v641 = vld [vmem:[#allocation2 + $0x38] sm:$0xf]
    %v642 = vld [vmem:[#allocation2 + $0x3c] sm:$0xf]
    %v643 = vld [vmem:[#allocation2 + $0x40] sm:$0xf]
    %v644 = vld [vmem:[#allocation2 + $0x44] sm:$0xf]
    %v645 = vld [vmem:[#allocation2 + $0x48] sm:$0xf]
    %v646 = vld [vmem:[#allocation2 + $0x4c] sm:$0xf]
    %v647 = vld [vmem:[#allocation2 + $0x50] sm:$0xf]
    %v648 = vld [vmem:[#allocation2 + $0x54] sm:$0xf]
    %v649 = vld [vmem:[#allocation2 + $0x58] sm:$0xf]
    %v650 = vld [vmem:[#allocation2 + $0x5c] sm:$0xf]
    %v651 = vld [vmem:[#allocation2 + $0x60] sm:$0xf]
    %v652 = vld [vmem:[#allocation2 + $0x64] sm:$0xf]
    %v653 = vld [vmem:[#allocation2 + $0x68] sm:$0xf]
    %v654 = vld [vmem:[#allocation2 + $0x6c] sm:$0xf]
    %v655 = vld [vmem:[#allocation2 + $0x70] sm:$0xf]
    %v656 = vld [vmem:[#allocation2 + $0x74] sm:$0xf]
    %v657 = vld [vmem:[#allocation2 + $0x78] sm:$0xf]
    %v658 = vld [vmem:[#allocation2 + $0x7c] sm:$0xf]
    %v659 = vld [vmem:[#allocation2 + $0x80] sm:$0xf]
    %v660 = vld [vmem:[#allocation2 + $0x84] sm:$0xf]
    %v661 = vld [vmem:[#allocation2 + $0x88] sm:$0xf]
    %v662 = vld [vmem:[#allocation2 + $0x8c] sm:$0xf]
    %s663 = scalar_lea.vmem [#allocation5], 128
    %v664 = vld [vmem:[%s663] sm:$0xf]
    %v665 = vld [vmem:[%s663 + $0x4] sm:$0xf]
    %v666 = vld [vmem:[%s663 + $0x8] sm:$0xf]
    %v667 = vld [vmem:[%s663 + $0xc] sm:$0xf]
    %v668 = vld [vmem:[%s663 + $0x10] sm:$0xf]
    %v669 = vld [vmem:[%s663 + $0x14] sm:$0xf]
    %v670 = vld [vmem:[%s663 + $0x18] sm:$0xf]
    %v671 = vld [vmem:[%s663 + $0x1c] sm:$0xf]
    %v672 = vld [vmem:[%s663 + $0x20] sm:$0xf]
    %v673 = vld [vmem:[%s663 + $0x24] sm:$0xf]
    %v674 = vld [vmem:[%s663 + $0x28] sm:$0xf]
    %v675 = vld [vmem:[%s663 + $0x2c] sm:$0xf]
    %v676 = vld [vmem:[%s663 + $0x30] sm:$0xf]
    %v677 = vld [vmem:[%s663 + $0x34] sm:$0xf]
    %v678 = vld [vmem:[%s663 + $0x38] sm:$0xf]
    %v679 = vld [vmem:[%s663 + $0x3c] sm:$0xf]
    %v712 = vunpack.c.l.b16 %v631
    %v713 = vunpack.c.l.b16 %v632
    %v714 = vunpack.c.l.b16 %v633
    %v715 = vunpack.c.l.b16 %v634
    %v716 = vunpack.c.l.b16 %v635
    %v717 = vunpack.c.l.b16 %v636
    %v718 = vunpack.c.l.b16 %v637
    %v719 = vunpack.c.l.b16 %v638
    %v720 = vunpack.c.l.b16 %v639
    %v721 = vunpack.c.l.b16 %v640
    %v722 = vunpack.c.l.b16 %v641
    %v723 = vunpack.c.l.b16 %v642
    %v724 = vunpack.c.l.b16 %v643
    %v725 = vunpack.c.l.b16 %v644
    %v726 = vunpack.c.l.b16 %v645
    %v727 = vunpack.c.l.b16 %v646
    %v728 = vunpack.c.l.b16 %v647
    %v729 = vunpack.c.l.b16 %v648
    %v730 = vunpack.c.l.b16 %v649
    %v731 = vunpack.c.l.b16 %v650
    %v732 = vunpack.c.l.b16 %v651
    %v733 = vunpack.c.l.b16 %v652
    %v734 = vunpack.c.l.b16 %v653
    %v735 = vunpack.c.l.b16 %v654
    %v736 = vunpack.c.l.b16 %v655
    %v737 = vunpack.c.l.b16 %v656
    %v738 = vunpack.c.l.b16 %v657
    %v739 = vunpack.c.l.b16 %v658
    %v740 = vunpack.c.l.b16 %v659
    %v741 = vunpack.c.l.b16 %v660
    %v742 = vunpack.c.l.b16 %v661
    %v743 = vunpack.c.l.b16 %v662
    %v744 = vpack.c.b16 %v713, %v712
    %v745 = vpack.c.b16 %v715, %v714
    %v746 = vpack.c.b16 %v717, %v716
    %v747 = vpack.c.b16 %v719, %v718
    %v748 = vpack.c.b16 %v721, %v720
    %v749 = vpack.c.b16 %v723, %v722
    %v750 = vpack.c.b16 %v725, %v724
    %v751 = vpack.c.b16 %v727, %v726
    %v752 = vpack.c.b16 %v729, %v728
    %v753 = vpack.c.b16 %v731, %v730
    %v754 = vpack.c.b16 %v733, %v732
    %v755 = vpack.c.b16 %v735, %v734
    %v756 = vpack.c.b16 %v737, %v736
    %v757 = vpack.c.b16 %v739, %v738
    %v758 = vpack.c.b16 %v741, %v740
    %v759 = vpack.c.b16 %v743, %v742
    %v792 = vunpack.c.l.b16 %v664
    %v793 = vunpack.c.l.b16 %v665
    %v794 = vunpack.c.l.b16 %v666
    %v795 = vunpack.c.l.b16 %v667
    %v796 = vunpack.c.l.b16 %v668
    %v797 = vunpack.c.l.b16 %v669
    %v798 = vunpack.c.l.b16 %v670
    %v799 = vunpack.c.l.b16 %v671
    %v800 = vunpack.c.l.b16 %v672
    %v801 = vunpack.c.l.b16 %v673
    %v802 = vunpack.c.l.b16 %v674
    %v803 = vunpack.c.l.b16 %v675
    %v804 = vunpack.c.l.b16 %v676
    %v805 = vunpack.c.l.b16 %v677
    %v806 = vunpack.c.l.b16 %v678
    %v807 = vunpack.c.l.b16 %v679
    %v808 = vpack.c.b16 %v793, %v792
    %v809 = vpack.c.b16 %v795, %v794
    %v810 = vpack.c.b16 %v797, %v796
    %v811 = vpack.c.b16 %v799, %v798
    %v812 = vpack.c.b16 %v801, %v800
    %v813 = vpack.c.b16 %v803, %v802
    %v814 = vpack.c.b16 %v805, %v804
    %v815 = vpack.c.b16 %v807, %v806
    %824 = vmatprep.subr.bf16.mxu0 0
    %825 = vmatpush1.bf16.msra.mxu0 %v808
    %826 = vmatprep.subr.bf16.mxu0 0
    %827 = vmatpush1.bf16.msra.mxu0 %v809
    %828 = vmatprep.subr.bf16.mxu0 0
    %829 = vmatpush1.bf16.msra.mxu0 %v810
    %830 = vmatprep.subr.bf16.mxu0 0
    %831 = vmatpush1.bf16.msra.mxu0 %v811
    %832 = vmatprep.subr.bf16.mxu0 0
    %833 = vmatpush1.bf16.msra.mxu0 %v812
    %834 = vmatprep.subr.bf16.mxu0 0
    %835 = vmatpush1.bf16.msra.mxu0 %v813
    %836 = vmatprep.subr.bf16.mxu0 0
    %837 = vmatpush1.bf16.msra.mxu0 %v814
    %838 = vmatprep.subr.bf16.mxu0 0
    %839 = vmatpush1.bf16.msra.mxu0 %v815
    %840 = vmatprep.subr.bf16.mxu0 0
    %841 = vmatpush1.bf16.msra.mxu0 0
    %842 = vmatprep.subr.bf16.mxu0 0
    %843 = vmatpush1.bf16.msra.mxu0 0
    %844 = vmatprep.subr.bf16.mxu0 0
    %845 = vmatpush1.bf16.msra.mxu0 0
    %846 = vmatprep.subr.bf16.mxu0 0
    %847 = vmatpush1.bf16.msra.mxu0 0
    %848 = vmatprep.subr.bf16.mxu0 0
    %849 = vmatpush1.bf16.msra.mxu0 0
    %850 = vmatprep.subr.bf16.mxu0 0
    %851 = vmatpush1.bf16.msra.mxu0 0
    %852 = vmatprep.subr.bf16.mxu0 0
    %853 = vmatpush1.bf16.msra.mxu0 0
    %854 = vmatprep.subr.bf16.mxu0 0
    %855 = vmatpush1.bf16.msra.mxu0 0
    %856 = vmatprep.mubr.bf16.mxu0 0
    %857 = vmatmul.mubr.bf16.gmra.mrb[0].mxu0 %v744
    %v858 = vpop.f32.mrb[0].mxu0
    %v859 = vadd.f32 0.0, %v858
    %v860 = vpop.f32.mrb[0].mxu0
    %v861 = vpop.f32.mrb[0].mxu0
    %v862 = vadd.f32 0.0, %v861
    %v863 = vpop.f32.mrb[0].mxu0
    %864 = vmatprep.mubr.bf16.mxu0 0
    %865 = vmatmul.mubr.bf16.gmra.mrb[0].mxu0 %v745
    %v866 = vpop.f32.mrb[0].mxu0
    %v867 = vadd.f32 0.0, %v866
    %v868 = vpop.f32.mrb[0].mxu0
    %v869 = vpop.f32.mrb[0].mxu0
    %v870 = vadd.f32 0.0, %v869
    %v871 = vpop.f32.mrb[0].mxu0
    %872 = vmatprep.mubr.bf16.mxu0 0
    %873 = vmatmul.mubr.bf16.gmra.mrb[0].mxu0 %v746
    %v874 = vpop.f32.mrb[0].mxu0
    %v875 = vadd.f32 0.0, %v874
    %v876 = vpop.f32.mrb[0].mxu0
    %v877 = vpop.f32.mrb[0].mxu0
    %v878 = vadd.f32 0.0, %v877
    %v879 = vpop.f32.mrb[0].mxu0
    %880 = vmatprep.mubr.bf16.mxu0 0
    %881 = vmatmul.mubr.bf16.gmra.mrb[0].mxu0 %v747
    %v882 = vpop.f32.mrb[0].mxu0
    %v883 = vadd.f32 0.0, %v882
    %v884 = vpop.f32.mrb[0].mxu0
    %v885 = vpop.f32.mrb[0].mxu0
    %v886 = vadd.f32 0.0, %v885
    %v887 = vpop.f32.mrb[0].mxu0
    %888 = vmatprep.mubr.bf16.mxu0 0
    %889 = vmatmul.mubr.bf16.gmra.mrb[0].mxu0 %v748
    %v890 = vpop.f32.mrb[0].mxu0
    %v891 = vadd.f32 0.0, %v890
    %v892 = vpop.f32.mrb[0].mxu0
    %v893 = vpop.f32.mrb[0].mxu0
    %v894 = vadd.f32 0.0, %v893
    %v895 = vpop.f32.mrb[0].mxu0
    %896 = vmatprep.mubr.bf16.mxu0 0
    %897 = vmatmul.mubr.bf16.gmra.mrb[0].mxu0 %v749
    %v898 = vpop.f32.mrb[0].mxu0
    %v899 = vadd.f32 0.0, %v898
    %v900 = vpop.f32.mrb[0].mxu0
    %v901 = vpop.f32.mrb[0].mxu0
    %v902 = vadd.f32 0.0, %v901
    %v903 = vpop.f32.mrb[0].mxu0
    %904 = vmatprep.mubr.bf16.mxu0 0
    %905 = vmatmul.mubr.bf16.gmra.mrb[0].mxu0 %v750
    %v906 = vpop.f32.mrb[0].mxu0
    %v907 = vadd.f32 0.0, %v906
    %v908 = vpop.f32.mrb[0].mxu0
    %v909 = vpop.f32.mrb[0].mxu0
    %v910 = vadd.f32 0.0, %v909
    %v911 = vpop.f32.mrb[0].mxu0
    %912 = vmatprep.mubr.bf16.mxu0 0
    %913 = vmatmul.mubr.bf16.gmra.mrb[0].mxu0 %v751
    %v914 = vpop.f32.mrb[0].mxu0
    %v915 = vadd.f32 0.0, %v914
    %v916 = vpop.f32.mrb[0].mxu0
    %v917 = vpop.f32.mrb[0].mxu0
    %v918 = vadd.f32 0.0, %v917
    %v919 = vpop.f32.mrb[0].mxu0
    %920 = vmatprep.mubr.bf16.mxu0 0
    %921 = vmatmul.mubr.bf16.gmra.mrb[0].mxu0 %v752
    %v922 = vpop.f32.mrb[0].mxu0
    %v923 = vadd.f32 0.0, %v922
    %v924 = vpop.f32.mrb[0].mxu0
    %v925 = vpop.f32.mrb[0].mxu0
    %v926 = vadd.f32 0.0, %v925
    %v927 = vpop.f32.mrb[0].mxu0
    %928 = vmatprep.mubr.bf16.mxu0 0
    %929 = vmatmul.mubr.bf16.gmra.mrb[0].mxu0 %v753
    %v930 = vpop.f32.mrb[0].mxu0
    %v931 = vadd.f32 0.0, %v930
    %v932 = vpop.f32.mrb[0].mxu0
    %v933 = vpop.f32.mrb[0].mxu0
    %v934 = vadd.f32 0.0, %v933
    %v935 = vpop.f32.mrb[0].mxu0
    %936 = vmatprep.mubr.bf16.mxu0 0
    %937 = vmatmul.mubr.bf16.gmra.mrb[0].mxu0 %v754
    %v938 = vpop.f32.mrb[0].mxu0
    %v939 = vadd.f32 0.0, %v938
    %v940 = vpop.f32.mrb[0].mxu0
    %v941 = vpop.f32.mrb[0].mxu0
    %v942 = vadd.f32 0.0, %v941
    %v943 = vpop.f32.mrb[0].mxu0
    %944 = vmatprep.mubr.bf16.mxu0 0
    %945 = vmatmul.mubr.bf16.gmra.mrb[0].mxu0 %v755
    %v946 = vpop.f32.mrb[0].mxu0
    %v947 = vadd.f32 0.0, %v946
    %v948 = vpop.f32.mrb[0].mxu0
    %v949 = vpop.f32.mrb[0].mxu0
    %v950 = vadd.f32 0.0, %v949
    %v951 = vpop.f32.mrb[0].mxu0
    %952 = vmatprep.mubr.bf16.mxu0 0
    %953 = vmatmul.mubr.bf16.gmra.mrb[0].mxu0 %v756
    %v954 = vpop.f32.mrb[0].mxu0
    %v955 = vadd.f32 0.0, %v954
    %v956 = vpop.f32.mrb[0].mxu0
    %v957 = vpop.f32.mrb[0].mxu0
    %v958 = vadd.f32 0.0, %v957
    %v959 = vpop.f32.mrb[0].mxu0
    %960 = vmatprep.mubr.bf16.mxu0 0
    %961 = vmatmul.mubr.bf16.gmra.mrb[0].mxu0 %v757
    %v962 = vpop.f32.mrb[0].mxu0
    %v963 = vadd.f32 0.0, %v962
    %v964 = vpop.f32.mrb[0].mxu0
    %v965 = vpop.f32.mrb[0].mxu0
    %v966 = vadd.f32 0.0, %v965
    %v967 = vpop.f32.mrb[0].mxu0
    %968 = vmatprep.mubr.bf16.mxu0 0
    %969 = vmatmul.mubr.bf16.gmra.mrb[0].mxu0 %v758
    %v970 = vpop.f32.mrb[0].mxu0
    %v971 = vadd.f32 0.0, %v970
    %v972 = vpop.f32.mrb[0].mxu0
    %v973 = vpop.f32.mrb[0].mxu0
    %v974 = vadd.f32 0.0, %v973
    %v975 = vpop.f32.mrb[0].mxu0
    %976 = vmatprep.mubr.bf16.mxu0 0
    %977 = vmatmul.mubr.bf16.gmra.mrb[0].mxu0 %v759
    %v978 = vpop.f32.mrb[0].mxu0
    %v979 = vadd.f32 0.0, %v978
    %v980 = vpop.f32.mrb[0].mxu0
    %v981 = vpop.f32.mrb[0].mxu0
    %v982 = vadd.f32 0.0, %v981
    %v983 = vpop.f32.mrb[0].mxu0
    %984 = vdwg.mxu0
    %v985 = vadd.f32 %v505, %v859
    %v986 = vadd.f32 %v508, %v862
    %v987 = vadd.f32 %v513, %v867
    %v988 = vadd.f32 %v516, %v870
    %v989 = vadd.f32 %v521, %v875
    %v990 = vadd.f32 %v524, %v878
    %v991 = vadd.f32 %v529, %v883
    %v992 = vadd.f32 %v532, %v886
    %v993 = vadd.f32 %v537, %v891
    %v994 = vadd.f32 %v540, %v894
    %v995 = vadd.f32 %v545, %v899
    %v996 = vadd.f32 %v548, %v902
    %v997 = vadd.f32 %v553, %v907
    %v998 = vadd.f32 %v556, %v910
    %v999 = vadd.f32 %v561, %v915
    %v1000 = vadd.f32 %v564, %v918
    %v1001 = vadd.f32 %v569, %v923
    %v1002 = vadd.f32 %v572, %v926
    %v1003 = vadd.f32 %v577, %v931
    %v1004 = vadd.f32 %v580, %v934
    %v1005 = vadd.f32 %v585, %v939
    %v1006 = vadd.f32 %v588, %v942
    %v1007 = vadd.f32 %v593, %v947
    %v1008 = vadd.f32 %v596, %v950
    %v1009 = vadd.f32 %v601, %v955
    %v1010 = vadd.f32 %v604, %v958
    %v1011 = vadd.f32 %v609, %v963
    %v1012 = vadd.f32 %v612, %v966
    %v1013 = vadd.f32 %v617, %v971
    %v1014 = vadd.f32 %v620, %v974
    %v1015 = vadd.f32 %v625, %v979
    %v1016 = vadd.f32 %v628, %v982
    %v1017 = vld [vmem:[%s2] sm:$0x1]
    %v1019 = vlaneseq
    %v1020 = vshrl.u32 %v1019, 7
    %v1021 = vsub.s32 0, %v1020
    %v1022 = vrot.slane %v1017, %v1021
    %v1024 = vadd.f32 %v985, %v1022
    %v1025 = vadd.f32 %v986, %v1022
    %v1026 = vadd.f32 %v987, %v1022
    %v1027 = vadd.f32 %v988, %v1022
    %v1028 = vadd.f32 %v989, %v1022
    %v1029 = vadd.f32 %v990, %v1022
    %v1030 = vadd.f32 %v991, %v1022
    %v1031 = vadd.f32 %v992, %v1022
    %v1032 = vadd.f32 %v993, %v1022
    %v1033 = vadd.f32 %v994, %v1022
    %v1034 = vadd.f32 %v995, %v1022
    %v1035 = vadd.f32 %v996, %v1022
    %v1036 = vadd.f32 %v997, %v1022
    %v1037 = vadd.f32 %v998, %v1022
    %v1038 = vadd.f32 %v999, %v1022
    %v1039 = vadd.f32 %v1000, %v1022
    %v1040 = vadd.f32 %v1001, %v1022
    %v1041 = vadd.f32 %v1002, %v1022
    %v1042 = vadd.f32 %v1003, %v1022
    %v1043 = vadd.f32 %v1004, %v1022
    %v1044 = vadd.f32 %v1005, %v1022
    %v1045 = vadd.f32 %v1006, %v1022
    %v1046 = vadd.f32 %v1007, %v1022
    %v1047 = vadd.f32 %v1008, %v1022
    %v1048 = vadd.f32 %v1009, %v1022
    %v1049 = vadd.f32 %v1010, %v1022
    %v1050 = vadd.f32 %v1011, %v1022
    %v1051 = vadd.f32 %v1012, %v1022
    %v1052 = vadd.f32 %v1013, %v1022
    %v1053 = vadd.f32 %v1014, %v1022
    %v1054 = vadd.f32 %v1015, %v1022
    %v1055 = vadd.f32 %v1016, %v1022
    %1056 = vst [vmem:[#allocation7] sm:$0xff] %v1024
    %1057 = vst [vmem:[#allocation7 + $0x8] sm:$0xff] %v1025
    %1058 = vst [vmem:[#allocation7 + $0x10] sm:$0xff] %v1026
    %1059 = vst [vmem:[#allocation7 + $0x18] sm:$0xff] %v1027
    %1060 = vst [vmem:[#allocation7 + $0x20] sm:$0xff] %v1028
    %1061 = vst [vmem:[#allocation7 + $0x28] sm:$0xff] %v1029
    %1062 = vst [vmem:[#allocation7 + $0x30] sm:$0xff] %v1030
    %1063 = vst [vmem:[#allocation7 + $0x38] sm:$0xff] %v1031
    %1064 = vst [vmem:[#allocation7 + $0x40] sm:$0xff] %v1032
    %1065 = vst [vmem:[#allocation7 + $0x48] sm:$0xff] %v1033
    %1066 = vst [vmem:[#allocation7 + $0x50] sm:$0xff] %v1034
    %1067 = vst [vmem:[#allocation7 + $0x58] sm:$0xff] %v1035
    %1068 = vst [vmem:[#allocation7 + $0x60] sm:$0xff] %v1036
    %1069 = vst [vmem:[#allocation7 + $0x68] sm:$0xff] %v1037
    %1070 = vst [vmem:[#allocation7 + $0x70] sm:$0xff] %v1038
    %1071 = vst [vmem:[#allocation7 + $0x78] sm:$0xff] %v1039
    %1072 = vst [vmem:[#allocation7 + $0x80] sm:$0xff] %v1040
    %1073 = vst [vmem:[#allocation7 + $0x88] sm:$0xff] %v1041
    %1074 = vst [vmem:[#allocation7 + $0x90] sm:$0xff] %v1042
    %1075 = vst [vmem:[#allocation7 + $0x98] sm:$0xff] %v1043
    %1076 = vst [vmem:[#allocation7 + $0xa0] sm:$0xff] %v1044
    %1077 = vst [vmem:[#allocation7 + $0xa8] sm:$0xff] %v1045
    %1078 = vst [vmem:[#allocation7 + $0xb0] sm:$0xff] %v1046
    %1079 = vst [vmem:[#allocation7 + $0xb8] sm:$0xff] %v1047
    %1080 = vst [vmem:[#allocation7 + $0xc0] sm:$0xff] %v1048
    %1081 = vst [vmem:[#allocation7 + $0xc8] sm:$0xff] %v1049
    %1082 = vst [vmem:[#allocation7 + $0xd0] sm:$0xff] %v1050
    %1083 = vst [vmem:[#allocation7 + $0xd8] sm:$0xff] %v1051
    %1084 = vst [vmem:[#allocation7 + $0xe0] sm:$0xff] %v1052
    %1085 = vst [vmem:[#allocation7 + $0xe8] sm:$0xff] %v1053
    %1086 = vst [vmem:[#allocation7 + $0xf0] sm:$0xff] %v1054
    %1087 = vst [vmem:[#allocation7 + $0xf8] sm:$0xff] %v1055
    // Predicated region
    $region22: #{tpu_custom_call.1} parent=1 // pred_check
      _
    $region23: #{tpu_custom_call.1} parent=1 // pred_check_branch
      %1089 = sbr.rel (0) target = $region25
    $region24: #{tpu_custom_call.1} parent=1 // pred_region
      %s1091 = ssub.s32 4096, 4096
      %1092 = vsyncadd [#allocation4], %s1091
      %s1093 = sshll.u32 [#allocation7], 4
      %s1094 = int_to_ptr.vmem [resolvable:$true] %s1093
      %1099 = dma.vmem_to_hbm [thread:$0]  %s1094, 4096, %s3, [#allocation4], 128, 128, 8
    $region25: #{tpu_custom_call.1} parent=1 // pred_fallthru
      _
    // Predicated region
    $region26: #{tpu_custom_call.1} parent=1 // pred_check
      _
    $region27: #{tpu_custom_call.1} parent=1 // pred_check_branch
      %1101 = sbr.rel (0) target = $region29
    $region28: #{tpu_custom_call.1} parent=1 // pred_region
      %1102 = dma.done [#allocation4], 4096
    $region29: #{tpu_custom_call.1} parent=1 // pred_fallthru
      _
    %1103 = vsyncpa [#allocation3], 1
    %1104 = vsyncpa [#allocation6], 1
    %1105 = vsyncpa [#allocation4], 1

</llo_original>
